<compile_context>
chip_gen: v5e
topology: v5e:2x2
jax: 0.10.0
libtpu: 0.0.40
codegen_flags: <defaults>
</compile_context>

<pallas_src>
import time

import jax
import jax.numpy as jnp
from jax import lax
from jax.experimental import pallas as pl
from jax.experimental.pallas import tpu as pltpu


MAX_TM = 2048                    # max row-tile (f32 working set stays ~1 MiB)
VMEM_LIMIT = 32 * 1024 * 1024    # scoped VMEM budget; fits v5e/v6e/v7x


def _round_up(n, m):
    return -(-n // m) * m


def _tiles(m):
    """Row tiling: (tm, padded_M, num_tiles) with minimal fragmentation."""
    if m <= MAX_TM:
        # Single tile covering the full row extent (always a legal block:
        # block dim == full array dim).  No padding at all.
        return m, m, 1
    n_tiles = -(-m // MAX_TM)
    # Even tiles, 128-aligned (natural MXU LHS granularity on v5e; at most a
    # partial final pass on v6e/v7x) -> padding bounded by 128*n_tiles rows.
    tm = _round_up(-(-m // n_tiles), 128)
    return tm, tm * n_tiles, n_tiles


# ----------------------------- Pallas kernels ------------------------------

def _linear_fwd_kernel(x_ref, w_ref, b_ref, o_ref):
    # x: (TM, Fin), w: (Fout, Fin)  [PyTorch layout], b: (1, Fout)
    # y = x @ W^T + b, expressed as a transposed contraction (no transpose op).
    acc = lax.dot_general(
        x_ref[...], w_ref[...],
        dimension_numbers=(((1,), (1,)), ((), ())),
        preferred_element_type=jnp.float32)
    o_ref[...] = (acc + b_ref[...]).astype(o_ref.dtype)


def _linear_dx_kernel(g_ref, w_ref, dx_ref):
    # dx = g @ W -> (TM, Fin); pure map over M, no cross-step state.
    dx_ref[...] = lax.dot_general(
        g_ref[...], w_ref[...],
        dimension_numbers=(((1,), (0,)), ((), ())),
        preferred_element_type=jnp.float32).astype(dx_ref.dtype)


def _linear_dwdb_kernel(g_ref, x_ref, dw_ref, db_ref):
    # dW/db reduction over the M grid axis.  Output BlockSpecs use a constant
    # block index, so dw_ref/db_ref stay VMEM-resident across the grid and we
    # accumulate directly into them (no scratch, no final copy).
    i = pl.program_id(0)

    @pl.when(i == 0)
    def _():
        dw_ref[...] = jnp.zeros_like(dw_ref)
        db_ref[...] = jnp.zeros_like(db_ref)

    g = g_ref[...]
    # dW += g^T @ x -> (Fout, Fin): transposed contraction, no materialized g.T
    dw_ref[...] += lax.dot_general(
        g, x_ref[...],
        dimension_numbers=(((0,), (0,)), ((), ())),
        preferred_element_type=jnp.float32)
    # db += column sums of g -> (1, Fout)
    db_ref[...] += jnp.sum(g, axis=0, keepdims=True)


# ------------------------- jitted host-side wrappers ------------------------

@jax.jit
def linear_forward(x, w, b2d):
    """x: (B, S, Fin); w: (Fout, Fin); b2d: (1, Fout)."""
    B, S, fin = x.shape
    fout = w.shape[0]
    M = B * S
    tm, m_pad, n_tiles = _tiles(M)

    x2d = x.reshape(M, fin)                       # free reshape
    if m_pad != M:                                # only when M > MAX_TM and ragged
        x2d = jnp.pad(x2d, ((0, m_pad - M), (0, 0)))

    y = pl.pallas_call(
        _linear_fwd_kernel,
        out_shape=jax.ShapeDtypeStruct((m_pad, fout), x.dtype),
        grid_spec=pltpu.PrefetchScalarGridSpec(
            num_scalar_prefetch=0,
            grid=(n_tiles,),
            in_specs=[
                pl.BlockSpec((tm, fin), lambda i: (i, 0)),
                pl.BlockSpec((fout, fin), lambda i: (0, 0)),
                pl.BlockSpec((1, fout), lambda i: (0, 0)),
            ],
            out_specs=pl.BlockSpec((tm, fout), lambda i: (i, 0)),
        ),
        compiler_params=pltpu.CompilerParams(
            dimension_semantics=("parallel",),
            vmem_limit_bytes=VMEM_LIMIT),
    )(x2d, w, b2d)

    if m_pad != M:
        y = y[:M]
    return y.reshape(B, S, fout)


@jax.jit
def linear_backward(grad_out, x, w):
    """grad_out: (B, S, Fout); x: (B, S, Fin); w: (Fout, Fin)."""
    B, S, fin = x.shape
    fout = w.shape[0]
    M = B * S
    tm, m_pad, n_tiles = _tiles(M)

    g2d = grad_out.reshape(M, fout)
    x2d = x.reshape(M, fin)
    if m_pad != M:
        # Zero rows so they contribute nothing to the dW/db reduction.
        g2d = jnp.pad(g2d, ((0, m_pad - M), (0, 0)))
        x2d = jnp.pad(x2d, ((0, m_pad - M), (0, 0)))

    # --- dx: parallel over M (both TensorCores on v7x) ----------------------
    dx = pl.pallas_call(
        _linear_dx_kernel,
        out_shape=jax.ShapeDtypeStruct((m_pad, fin), x.dtype),
        grid_spec=pltpu.PrefetchScalarGridSpec(
            num_scalar_prefetch=0,
            grid=(n_tiles,),
            in_specs=[
                pl.BlockSpec((tm, fout), lambda i: (i, 0)),
                pl.BlockSpec((fout, fin), lambda i: (0, 0)),
            ],
            out_specs=pl.BlockSpec((tm, fin), lambda i: (i, 0)),
        ),
        compiler_params=pltpu.CompilerParams(
            dimension_semantics=("parallel",),
            vmem_limit_bytes=VMEM_LIMIT),
    )(g2d, w)

    # --- dW/db: reduction over M, accumulate into VMEM-resident outputs ----
    dw, db2d = pl.pallas_call(
        _linear_dwdb_kernel,
        out_shape=(
            jax.ShapeDtypeStruct((fout, fin), jnp.float32),
            jax.ShapeDtypeStruct((1, fout), jnp.float32),
        ),
        grid_spec=pltpu.PrefetchScalarGridSpec(
            num_scalar_prefetch=0,
            grid=(n_tiles,),
            in_specs=[
                pl.BlockSpec((tm, fout), lambda i: (i, 0)),
                pl.BlockSpec((tm, fin), lambda i: (i, 0)),
            ],
            out_specs=(
                pl.BlockSpec((fout, fin), lambda i: (0, 0)),
                pl.BlockSpec((1, fout), lambda i: (0, 0)),
            ),
        ),
        compiler_params=pltpu.CompilerParams(
            dimension_semantics=("arbitrary",),
            vmem_limit_bytes=VMEM_LIMIT),
    )(g2d, x2d)

    if m_pad != M:
        dx = dx[:M]
    return dx.reshape(B, S, fin), dw, db2d[0]


# ------------------------- profiling Wrapper (glue) -------------------------

def avg_time(times):
    # Robust version of autopipe's avg_time: single sample -> return it;
    # never divide by zero even if all samples equal the max.
    if len(times) == 1:
        return times[0]
    max_v = max(times)
    rest = [t for t in times if t < max_v]
    if not rest:
        return max_v
    return sum(rest) / len(rest)


def _time_op(func, *inputs, repeats=5):
    """Warm-up (compile excluded) + min-of-N wall-clock timing in ms."""
    out = jax.block_until_ready(func(*inputs))      # warm-up / compile
    best = float("inf")
    for _ in range(repeats):
        start = time.perf_counter()
        out = jax.block_until_ready(func(*inputs))
        best = min(best, time.perf_counter() - start)
    return 1000.0 * best, out


class PallasLinearLayer:
    """The wrapped sub_module: nn.Linear(in_features, out_features)."""

    def __init__(self, in_features, out_features, key):
        kw, kb = jax.random.split(key)
        bound = 1.0 / (in_features ** 0.5)
        self.in_features = in_features
        self.out_features = out_features
        # nn.Linear-style U(-1/sqrt(fan_in), 1/sqrt(fan_in)) init.
        self.weight = jax.random.uniform(
            kw, (out_features, in_features), jnp.float32, -bound, bound)
        self.bias = jax.random.uniform(
            kb, (out_features,), jnp.float32, -bound, bound)
        # 2-D view of the bias for a legal (1, Fout) BlockSpec.
        self.bias2d = self.bias.reshape(1, out_features)

    def __call__(self, x):
        # x: (B, S, F_in) -> (B, S, F_out)
        return linear_forward(x, self.weight, self.bias2d)

    def backward(self, x, grad_out):
        return linear_backward(grad_out, x, self.weight)


class Wrapper:
    """Profiling wrapper: runs the layer forward (+ a random-cotangent
    backward) and records forward/backward wall-clock times; returns the
    layer outputs unchanged (mirrors autopipe's Wrapper)."""

    def __init__(self, sub_module, scope, save_memory_mode=False,
                 recomputation=False):
        assert isinstance(recomputation, bool)
        self.layer = sub_module
        self.forward_time = []
        self.backward_time = []
        self.scope = scope
        self.save_memory_mode = save_memory_mode
        self.recomputation = recomputation
        # TODO(synk): save_memory_mode device shuffling (cpu<->cuda) and CUDA
        # peak-memory accounting have no Pallas/TPU analogue; buffers stay in HBM.

    def __call__(self, *inputs):
        (x,) = inputs  # single-tensor input, as in the Linear demo

        forward_time, outputs = _time_op(self.layer, x)
        self.forward_time.append(forward_time)
        if self.recomputation:
            forward_time, outputs = _time_op(self.layer, x)

        # Emulate torch.autograd.backward with randn_like cotangents.
        grad_tensors = jax.random.normal(
            jax.random.PRNGKey(1234), outputs.shape, outputs.dtype)
        backward_time, _ = _time_op(self.layer.backward, x, grad_tensors)

        if self.recomputation:
            backward_time = forward_time + backward_time
        self.backward_time.append(backward_time)
        return outputs

    def avg_time(self, forward=False):
        if forward:
            return avg_time(self.forward_time)
        return avg_time(self.backward_time)


# ---------------------------------- main ------------------------------------

if __name__ == "__main__":
    key = jax.random.PRNGKey(0)
    k_layer, k_x = jax.random.split(key)

    B, S, H = 2, 8, 32
    layer = PallasLinearLayer(in_features=H, out_features=H, key=k_layer)
    wrapper = Wrapper(layer, scope="Linear[fc]")

    x = jax.random.normal(k_x, (B, S, H), jnp.float32)

    out = wrapper(x)
    out = jax.block_until_ready(out)

    # --- correctness checks against plain-JAX nn.Linear reference -----------
    ref = x @ layer.weight.T + layer.bias
    assert out.shape == (B, S, H)
    assert out.dtype == jnp.float32
    assert jnp.allclose(out, ref, atol=1e-5, rtol=1e-5)

    g = jax.random.normal(jax.random.PRNGKey(1234), out.shape, out.dtype)
    dx, dw, db = layer.backward(x, g)
    g2d = g.reshape(-1, H)
    x2d = x.reshape(-1, H)
    assert jnp.allclose(dx, (g2d @ layer.weight).reshape(B, S, H),
                        atol=1e-4, rtol=1e-4)
    assert jnp.allclose(dw, g2d.T @ x2d, atol=1e-4, rtol=1e-4)
    assert jnp.allclose(db, g2d.sum(axis=0), atol=1e-4, rtol=1e-4)

    # avg_time should also work with a single recorded sample.
    _ = wrapper.avg_time(forward=True)
    _ = wrapper.avg_time(forward=False)

    print("KERNEL_OK")
</pallas_src>

<mosaic_0001>
module attributes {stable_mosaic.version = 11 : i64} {
  func.func @_linear_fwd_kernel(%arg0: i32, %arg1: memref<16x32xf32, #tpu.memory_space<vmem>>, %arg2: memref<32x32xf32, #tpu.memory_space<vmem>>, %arg3: memref<1x32xf32, #tpu.memory_space<vmem>>, %arg4: memref<16x32xf32, #tpu.memory_space<vmem>>) attributes {dimension_semantics = [#tpu.dimension_semantics<parallel>], iteration_bounds = array<i64: 1>, scalar_prefetch = 0 : i64, scratch_operands = 0 : i64, tpu.core_type = #tpu.core_type<tc>, window_params = [{transform_indices = @transform_0, window_bounds = array<i64: 16, 32>}, {pipeline_mode = #tpu.pipeline_mode<synchronous>, transform_indices = @transform_1, window_bounds = array<i64: 32, 32>}, {pipeline_mode = #tpu.pipeline_mode<synchronous>, transform_indices = @transform_2, window_bounds = array<i64: 1, 32>}, {transform_indices = @transform_3, window_bounds = array<i64: 16, 32>}]} {
    %c0 = arith.constant 0 : index
    %c0_0 = arith.constant 0 : index
    %0 = vector.load %arg1[%c0, %c0_0] : memref<16x32xf32, #tpu.memory_space<vmem>>, vector<16x32xf32>
    %c0_1 = arith.constant 0 : index
    %c0_2 = arith.constant 0 : index
    %1 = vector.load %arg2[%c0_1, %c0_2] : memref<32x32xf32, #tpu.memory_space<vmem>>, vector<32x32xf32>
    %cst = arith.constant dense<0.000000e+00> : vector<16x32xf32>
    %2 = tpu.matmul %0, %1, %cst {dimension_numbers = #tpu.dot_dimension_numbers<[1], [1], [0], [0], [0, 0, 1, 0], [], []>} : vector<16x32xf32>, vector<32x32xf32>, vector<16x32xf32> -> vector<16x32xf32>
    %c0_3 = arith.constant 0 : index
    %c0_4 = arith.constant 0 : index
    %3 = vector.load %arg3[%c0_3, %c0_4] : memref<1x32xf32, #tpu.memory_space<vmem>>, vector<1x32xf32>
    %4 = vector.broadcast %3 : vector<1x32xf32> to vector<16x32xf32>
    %5 = arith.addf %2, %4 : vector<16x32xf32>
    %c0_5 = arith.constant 0 : index
    %c0_6 = arith.constant 0 : index
    %6 = vector.load %arg4[%c0_5, %c0_6] : memref<16x32xf32, #tpu.memory_space<vmem>>, vector<16x32xf32>
    tpu.vector_store %arg4[%c0_5, %c0_6], %5 {strides = array<i32>} : memref<16x32xf32, #tpu.memory_space<vmem>>, vector<16x32xf32>,
    return
  }
  func.func @transform_0(%arg0: i32) -> (i32, i32) {
    %c0_i32 = arith.constant 0 : i32
    %c0_i32_0 = arith.constant 0 : i32
    return %arg0, %c0_i32 : i32, i32
  }
  func.func @transform_1(%arg0: i32) -> (i32, i32) {
    %c0_i32 = arith.constant 0 : i32
    %c0_i32_0 = arith.constant 0 : i32
    %c0_i32_1 = arith.constant 0 : i32
    return %c0_i32, %c0_i32_0 : i32, i32
  }
  func.func @transform_2(%arg0: i32) -> (i32, i32) {
    %c0_i32 = arith.constant 0 : i32
    %c0_i32_0 = arith.constant 0 : i32
    %c0_i32_1 = arith.constant 0 : i32
    return %c0_i32, %c0_i32_0 : i32, i32
  }
  func.func @transform_3(%arg0: i32) -> (i32, i32) {
    %c0_i32 = arith.constant 0 : i32
    %c0_i32_0 = arith.constant 0 : i32
    return %arg0, %c0_i32 : i32, i32
  }
}

</mosaic_0001>

<llo_original>
// kernel: linear_forward.1
$region0: #{linear_forward.1}
  #allocation0 [shape = 'u32[]', space=smem, size = 0x4, offset = 0x4, fixed_abs, tag = 'smem constant byte address 0x4 - core index']
  #allocation1 [shape = 'u32[72,128]{1,0:T(1,128)}', space=vmem, size = 0x9000, scoped, tag = 'internal scratch']
  %s0 = inlined_call_operand.hbm [shape: f32[16,32], index: 0, kind: input, shape index: {}]
  %s1 = inlined_call_operand.hbm [shape: f32[32,32], index: 1, kind: input, shape index: {}]
  %s2 = inlined_call_operand.vmem [shape: f32[1,32], index: 2, kind: input, shape index: {}]
  %s3 = inlined_call_operand.hbm [shape: f32[16,32], index: 3, kind: output, shape index: {}]
  %s4 = sld [smem:[#allocation0]]
  $region30: #{linear_forward.1} parent=0
    _
  %s6 = ssub.s32 1, %s4
  %s7 = scalar_select 0, %s6, %s4
  $region1: #{linear_forward.1} parent=0
    #allocation2 [shape = 'u8[8192]{0}', space=vmem, size = 0x2000, scoped, tag = 'input window, operand 0, single buffered']
    #allocation3 [shape = 's32[1]{0}', space=sflag, size = 0x4, scoped, tag = 'scoped memory for linear_forward.1']
    #allocation4 [shape = 's32[1]{0}', space=sflag, size = 0x4, scoped, tag = 'scoped memory for linear_forward.1']
    #allocation5 [shape = 'u8[16384]{0}', space=vmem, size = 0x4000, scoped, tag = 'input window, operand 1, single buffered']
    #allocation6 [shape = 's32[1]{0}', space=sflag, size = 0x4, scoped, tag = 'scoped memory for linear_forward.1']
    #allocation7 [shape = 'u8[8192]{0}', space=vmem, size = 0x2000, scoped, tag = 'output window, operand 0, single buffered']
    %8 = vsyncpa [#allocation3], 0
    %9 = vsyncpa [#allocation6], 0
    %10 = vsyncpa [#allocation4], 0
    // Predicated region
    $region2: #{linear_forward.1} parent=1 // pred_check
      _
    $region3: #{linear_forward.1} parent=1 // pred_check_branch
      %12 = sbr.rel (0) target = $region5
    $region4: #{linear_forward.1} parent=1 // pred_region
      %14 = vsyncadd [#allocation3], 0
      %s15 = sshll.u32 %s0, 4
      %s16 = int_to_ptr.hbm [resolvable:$true] %s15
      %s17 = sshll.u32 [#allocation2], 4
      %s18 = int_to_ptr.vmem [resolvable:$true] %s17
      %23 = dma.hbm_to_vmem [thread:$0]  %s16, 256, %s18, [#allocation3], 128, 128, 8
    $region5: #{linear_forward.1} parent=1 // pred_fallthru
      _
    // Predicated region
    $region6: #{linear_forward.1} parent=1 // pred_check
      _
    $region7: #{linear_forward.1} parent=1 // pred_check_branch
      %25 = sbr.rel (0) target = $region9
    $region8: #{linear_forward.1} parent=1 // pred_region
      %27 = vsyncadd [#allocation6], 0
      %s28 = sshll.u32 %s1, 4
      %s29 = int_to_ptr.hbm [resolvable:$true] %s28
      %s30 = sshll.u32 [#allocation5], 4
      %s31 = int_to_ptr.vmem [resolvable:$true] %s30
      %36 = dma.hbm_to_vmem [thread:$0]  %s29, 512, %s31, [#allocation6], 128, 128, 8
    $region9: #{linear_forward.1} parent=1 // pred_fallthru
      _
    // Predicated region
    $region10: #{linear_forward.1} parent=1 // pred_check
      _
    $region11: #{linear_forward.1} parent=1 // pred_check_branch
      %38 = sbr.rel (0) target = $region13
    $region12: #{linear_forward.1} parent=1 // pred_region
      _
    $region13: #{linear_forward.1} parent=1 // pred_fallthru
      _
    // Predicated region
    $region14: #{linear_forward.1} parent=1 // pred_check
      _
    $region15: #{linear_forward.1} parent=1 // pred_check_branch
      %40 = sbr.rel (0) target = $region17
    $region16: #{linear_forward.1} parent=1 // pred_region
      %42 = dma.done [#allocation3], 256
    $region17: #{linear_forward.1} parent=1 // pred_fallthru
      _
    // Predicated region
    $region18: #{linear_forward.1} parent=1 // pred_check
      _
    $region19: #{linear_forward.1} parent=1 // pred_check_branch
      %44 = sbr.rel (0) target = $region21
    $region20: #{linear_forward.1} parent=1 // pred_region
      %46 = dma.done [#allocation6], 512
    $region21: #{linear_forward.1} parent=1 // pred_fallthru
      _
    %v47 = vld [vmem:[#allocation2] sm:$0xff]
    %v48 = vld [vmem:[#allocation2 + $0x8] sm:$0xff]
    %v49 = vld [vmem:[#allocation5] sm:$0xff]
    %v50 = vld [vmem:[#allocation5 + $0x8] sm:$0xff]
    %v51 = vld [vmem:[#allocation5 + $0x10] sm:$0xff]
    %v52 = vld [vmem:[#allocation5 + $0x18] sm:$0xff]
    %v53 = vld [vmem:[%s2] sm:$0x1]
    %v55 = vperm.slane %v53, 0
    %vm57 = vcmask 261120
    %v59 = vsel %vm57, %v47, 0
    %v62 = vsel %vm57, %v48, 0
    %v65 = vsel %vm57, %v49, 0
    %v68 = vsel %vm57, %v50, 0
    %v71 = vsel %vm57, %v51, 0
    %v74 = vsel %vm57, %v52, 0
    %76 = vmatpush.xpose.msra.mxu0 0.0
    %77 = vmatpush.xpose.msra.mxu0 0.0
    %78 = vmatpush.xpose.msra.mxu0 0.0
    %79 = vmatpush.xpose.msra.mxu0 0.0
    %80 = vmatpush.xpose.msra.mxu0 0.0
    %81 = vmatpush.xpose.msra.mxu0 0.0
    %82 = vmatpush.xpose.msra.mxu0 0.0
    %83 = vmatpush.xpose.msra.mxu0 0.0
    %84 = vmatpush.xpose.msra.mxu0 0.0
    %85 = vmatpush.xpose.msra.mxu0 0.0
    %86 = vmatpush.xpose.msra.mxu0 0.0
    %87 = vmatpush.xpose.msra.mxu0 0.0
    %88 = vmatpush.xpose.msra.mxu0 %v74
    %89 = vmatpush.xpose.msra.mxu0 %v71
    %90 = vmatpush.xpose.msra.mxu0 %v68
    %91 = vmatpush.xpose.msra.mxu0 %v65
    %92 = vmatmul.f32.gmra.mxu0 %v59
    %v93 = vpop.f32.mrf.mxu0
    %v94 = vadd.f32 %v55, %v93
    %95 = vmatmul.f32.gmra.mxu0 %v62
    %v96 = vpop.f32.mrf.mxu0
    %v97 = vadd.f32 %v55, %v96
    %98 = vdwg.mxu0
    %99 = vst.msk [vmem:[#allocation7] sm:$0xff] %vm57, %v94
    %100 = vst.msk [vmem:[#allocation7 + $0x8] sm:$0xff] %vm57, %v97
    // Predicated region
    $region22: #{linear_forward.1} parent=1 // pred_check
      _
    $region23: #{linear_forward.1} parent=1 // pred_check_branch
      %102 = sbr.rel (0) target = $region25
    $region24: #{linear_forward.1} parent=1 // pred_region
      %104 = vsyncadd [#allocation4], 0
      %s105 = sshll.u32 [#allocation7], 4
      %s106 = int_to_ptr.vmem [resolvable:$true] %s105
      %s107 = sshll.u32 %s3, 4
      %s108 = int_to_ptr.hbm [resolvable:$true] %s107
      %113 = dma.vmem_to_hbm [thread:$0]  %s106, 256, %s108, [#allocation4], 128, 128, 8
    $region25: #{linear_forward.1} parent=1 // pred_fallthru
      _
    // Predicated region
    $region26: #{linear_forward.1} parent=1 // pred_check
      _
    $region27: #{linear_forward.1} parent=1 // pred_check_branch
      %115 = sbr.rel (0) target = $region29
    $region28: #{linear_forward.1} parent=1 // pred_region
      %117 = dma.done [#allocation4], 256
    $region29: #{linear_forward.1} parent=1 // pred_fallthru
      _
    %118 = vsyncpa [#allocation3], 1
    %119 = vsyncpa [#allocation6], 1
    %120 = vsyncpa [#allocation4], 1

</llo_original>
